<compile_context>
chip_gen: v7x
topology: tpu7x:2x2x1
jax: 0.10.0
libtpu: 0.0.40
codegen_flags: <defaults>
</compile_context>

<pallas_src>
import jax
import jax.numpy as jnp
from jax.experimental import pallas as pl
from jax.experimental.pallas import tpu as pltpu

# Fixed (non-trainable) JND convolution kernels (used by the pure-JAX ref;
# the Pallas kernel applies their separable decomposition).
KERNEL_X = ((-1., 0., 1.), (-2., 0., 2.), (-1., 0., 1.))
KERNEL_Y = ((1., 2., 1.), (0., 0., 0.), (-1., -2., -1.))
KERNEL_LUM = ((1., 1., 1., 1., 1.),
              (1., 2., 2., 2., 1.),
              (1., 2., 0., 2., 1.),
              (1., 2., 2., 2., 1.),
              (1., 1., 1., 1., 1.))


def _jnd_loss_kernel(imgs_ref, imgsw_ref, sse_ref, ypad_ref):
    """One batch element per grid step; writes that element's SSE."""
    C = imgs_ref.shape[1]
    H = imgs_ref.shape[2]
    W = imgs_ref.shape[3]

    # ---- Luminance in [0, 255], written into a zero-padded (pad=2) VMEM
    # scratch. Only the border strips are re-zeroed each step (the scratch is
    # uninitialized and per-core under "parallel"); the interior is fully
    # overwritten every step.
    ypad_ref[0:2, :] = jnp.zeros((2, W + 4), jnp.float32)
    ypad_ref[H + 2:H + 4, :] = jnp.zeros((2, W + 4), jnp.float32)
    ypad_ref[:, 0:2] = jnp.zeros((H + 4, 2), jnp.float32)
    ypad_ref[:, W + 2:W + 4] = jnp.zeros((H + 4, 2), jnp.float32)
    y = ((255.0 * 0.299) * imgs_ref[0, 0]
         + (255.0 * 0.587) * imgs_ref[0, 1]
         + (255.0 * 0.114) * imgs_ref[0, 2])
    ypad_ref[2:2 + H, 2:2 + W] = y

    yp = ypad_ref[...]                     # (H+4, W+4)

    # ---- Vertical (sublane) pass of the separable stencils, width W+4.
    r0 = yp[0:H, :]
    r1 = yp[1:1 + H, :]
    r2 = yp[2:2 + H, :]
    r3 = yp[3:3 + H, :]
    r4 = yp[4:4 + H, :]
    c3 = r1 + r2 + r3                      # vertical [1,1,1]
    c5 = c3 + r0 + r4                      # vertical [1,1,1,1,1]
    vx = c3 + r2                           # vertical [1,2,1]   (Sobel-x)
    vy = r1 - r3                           # vertical [1,0,-1]  (Sobel-y)

    # ---- Horizontal (lane) pass -> (H, W) planes.
    box3 = c3[:, 1:1 + W] + c3[:, 2:2 + W] + c3[:, 3:3 + W]
    box5 = (c5[:, 0:W] + c5[:, 1:1 + W] + c5[:, 2:2 + W]
            + c5[:, 3:3 + W] + c5[:, 4:4 + W])
    center = r2[:, 2:2 + W]
    # KERNEL_LUM = box5 + box3 - 2*center ; conv output is divided by 32.
    la = (box5 + box3) * (1.0 / 32.0) - center * (1.0 / 16.0)
    gx = vx[:, 3:3 + W] - vx[:, 1:1 + W]
    gy = vy[:, 1:1 + W] + 2.0 * vy[:, 2:2 + W] + vy[:, 3:3 + W]

    # ---- Luminance adaptation (alpha = 1.0).
    la_lo = 17.0 * (1.0 - jnp.sqrt(la * (1.0 / 127.0) + 1e-3)) + 3.0
    la_hi = (3.0 / 128.0) * (la - 127.0) + 3.0
    la = jnp.where(la <= 127.0, la_lo, la_hi)

    # ---- Contrast masking (beta = 0.117), sqrt-free form:
    #      cm_mag = sqrt(g2); cm_mag**2.4 == g2**1.2; cm_mag**2 == g2.
    g2 = gx * gx + gy * gy
    g2_pow = jnp.where(g2 > 0.0,
                       jnp.exp(1.2 * jnp.log(jnp.maximum(g2, 1e-30))),
                       0.0)
    # NOTE: pl.reciprocal(g2 + 676.0, approx=True) would push this divide to
    # the EUP approximate path; kept as an exact divide to preserve f32-level
    # parity with the reference.
    cm = (0.117 * 16.0) * g2_pow / (g2 + 676.0)

    # ---- Heatmap (broadcast over the 3 channels, as in F.mse_loss).
    hmap = jnp.maximum(la + cm - 0.3 * jnp.minimum(la, cm), 5.0) * (1.0 / 255.0)

    # ---- Fused 3-channel MSE numerator:
    #      sum_c (|d_c| - h)^2 = d2 - 2*h*d1 + C*h^2,
    #      with d1 = sum_c |d_c| and d2 = sum_c d_c^2.
    d1 = jnp.zeros((H, W), jnp.float32)
    d2 = jnp.zeros((H, W), jnp.float32)
    for c in range(C):
        dlt = imgsw_ref[0, c] - imgs_ref[0, c]
        d1 = d1 + jnp.abs(dlt)
        d2 = d2 + dlt * dlt
    err = d2 - hmap * (2.0 * d1 - float(C) * hmap)

    sse = jnp.sum(err, axis=-1, keepdims=True)   # (H, 1)
    sse = jnp.sum(sse, axis=0, keepdims=True)    # (1, 1)
    sse_ref[0] = sse                             # per-batch partial SSE


def jnd_loss(imgs, imgs_w):
    """JNDLoss(loss_type=0).forward(imgs, imgs_w) — inputs in [0, 1], NCHW."""
    B, C, H, W = imgs.shape
    assert C == 3, "JND expects RGB images"
    imgs = imgs.astype(jnp.float32)
    imgs_w = imgs_w.astype(jnp.float32)

    # VMEM budget: two double-buffered image blocks + padded luminance scratch
    # + headroom for the ~8 live (H, W+4) f32 temporaries (2x safety margin).
    img_block = C * H * W * 4
    work = 10 * (H + 4) * (W + 4) * 4
    vmem_limit = int(min(max(2 * (2 * 2 * img_block + work), 32 * 2**20),
                         100 * 2**20))

    cost = pl.CostEstimate(
        flops=int(60 * B * H * W),
        transcendentals=int(4 * B * H * W),
        bytes_accessed=int(2 * B * C * H * W * 4 + B * 4),
    )

    partial_sse = pl.pallas_call(
        _jnd_loss_kernel,
        out_shape=jax.ShapeDtypeStruct((B, 1, 1), jnp.float32),
        grid_spec=pltpu.PrefetchScalarGridSpec(
            num_scalar_prefetch=0,
            grid=(B,),
            in_specs=[
                pl.BlockSpec((1, C, H, W), lambda b: (b, 0, 0, 0)),
                pl.BlockSpec((1, C, H, W), lambda b: (b, 0, 0, 0)),
            ],
            out_specs=pl.BlockSpec((1, 1, 1), lambda b: (b, 0, 0)),
            scratch_shapes=[pltpu.VMEM((H + 4, W + 4), jnp.float32)],
        ),
        compiler_params=pltpu.CompilerParams(
            dimension_semantics=("parallel",),     # batch is independent
            vmem_limit_bytes=vmem_limit),
        cost_estimate=cost,
    )(imgs, imgs_w)

    # Final reduction + mean in glue keeps the grid megacore-parallel.
    total = float(B * C * H * W)
    return jnp.sum(partial_sse) * (1.0 / total)


def jnd_loss_ref(imgs, imgs_w):
    """Pure-JAX reference (mirrors the PyTorch module with F.conv2d)."""
    x = 255.0 * imgs
    y = 0.299 * x[:, 0:1] + 0.587 * x[:, 1:2] + 0.114 * x[:, 2:3]  # (B,1,H,W)
    wlum = jnp.asarray(KERNEL_LUM, jnp.float32)[None, None]
    wx = jnp.asarray(KERNEL_X, jnp.float32)[None, None]
    wy = jnp.asarray(KERNEL_Y, jnp.float32)[None, None]

    def conv(inp, w, p):
        return jax.lax.conv_general_dilated(
            inp, w, (1, 1), [(p, p), (p, p)],
            dimension_numbers=("NCHW", "OIHW", "NCHW"))

    la = conv(y, wlum, 2) / 32.0
    la = jnp.where(la <= 127.0,
                   17.0 * (1.0 - jnp.sqrt(la / 127.0 + 1e-3)) + 3.0,
                   (3.0 / 128.0) * (la - 127.0) + 3.0)
    gx = conv(y, wx, 1)
    gy = conv(y, wy, 1)
    cm = jnp.sqrt(gx * gx + gy * gy)
    cm = 0.117 * (16.0 * jnp.where(cm > 0.0, cm ** 2.4, 0.0)
                  / (cm * cm + 26.0 ** 2))
    h = jnp.maximum(la + cm - 0.3 * jnp.minimum(la, cm), 5.0) / 255.0
    d = jnp.abs(imgs_w - imgs)
    return jnp.mean((d - h) ** 2)


if __name__ == "__main__":
    key = jax.random.PRNGKey(0)
    k1, k2 = jax.random.split(key)
    B, C, H, W = 2, 3, 16, 16
    imgs = jax.random.uniform(k1, (B, C, H, W), jnp.float32)
    imgs_w = jnp.clip(
        imgs + 0.02 * jax.random.normal(k2, (B, C, H, W), jnp.float32),
        0.0, 1.0)

    loss = jax.block_until_ready(jnd_loss(imgs, imgs_w))
    ref = jnd_loss_ref(imgs, imgs_w)
    assert jnp.allclose(loss, ref, rtol=3e-4, atol=1e-6), (loss, ref)
    print("KERNEL_OK")
</pallas_src>

<mosaic_0001>
module attributes {stable_mosaic.version = 11 : i64} {
  func.func @_jnd_loss_kernel(%arg0: i32, %arg1: memref<1x3x16x16xf32, #tpu.memory_space<vmem>>, %arg2: memref<1x3x16x16xf32, #tpu.memory_space<vmem>>, %arg3: memref<1x1x1xf32, #tpu.memory_space<vmem>>, %arg4: memref<20x20xf32, #tpu.memory_space<vmem>>) attributes {dimension_semantics = [#tpu.dimension_semantics<parallel>], iteration_bounds = array<i64: 2>, scalar_prefetch = 0 : i64, scratch_operands = 1 : i64, tpu.core_type = #tpu.core_type<tc>, window_params = [{transform_indices = @transform_0, window_bounds = array<i64: 1, 3, 16, 16>}, {transform_indices = @transform_1, window_bounds = array<i64: 1, 3, 16, 16>}, {transform_indices = @transform_2, window_bounds = array<i64: 1, 1, 1>}]} {
    %cst = arith.constant 0.000000e+00 : f32
    %0 = vector.broadcast %cst : f32 to vector<2x20xf32>
    %c0 = arith.constant 0 : index
    %c0_0 = arith.constant 0 : index
    %1 = vector.load %arg4[%c0, %c0_0] : memref<20x20xf32, #tpu.memory_space<vmem>>, vector<2x20xf32>
    tpu.vector_store %arg4[%c0, %c0_0], %0 {strides = array<i32>} : memref<20x20xf32, #tpu.memory_space<vmem>>, vector<2x20xf32>,
    %cst_1 = arith.constant 0.000000e+00 : f32
    %2 = vector.broadcast %cst_1 : f32 to vector<2x20xf32>
    %c18 = arith.constant 18 : index
    %c0_2 = arith.constant 0 : index
    %3 = vector.load %arg4[%c18, %c0_2] : memref<20x20xf32, #tpu.memory_space<vmem>>, vector<2x20xf32>
    tpu.vector_store %arg4[%c18, %c0_2], %2 {strides = array<i32>} : memref<20x20xf32, #tpu.memory_space<vmem>>, vector<2x20xf32>,
    %cst_3 = arith.constant 0.000000e+00 : f32
    %4 = vector.broadcast %cst_3 : f32 to vector<20x2xf32>
    %c0_4 = arith.constant 0 : index
    %c0_5 = arith.constant 0 : index
    %5 = vector.load %arg4[%c0_4, %c0_5] : memref<20x20xf32, #tpu.memory_space<vmem>>, vector<20x2xf32>
    tpu.vector_store %arg4[%c0_4, %c0_5], %4 {strides = array<i32>} : memref<20x20xf32, #tpu.memory_space<vmem>>, vector<20x2xf32>,
    %cst_6 = arith.constant 0.000000e+00 : f32
    %6 = vector.broadcast %cst_6 : f32 to vector<20x2xf32>
    %c0_7 = arith.constant 0 : index
    %c18_8 = arith.constant 18 : index
    %7 = vector.load %arg4[%c0_7, %c18_8] : memref<20x20xf32, #tpu.memory_space<vmem>>, vector<20x2xf32>
    tpu.vector_store %arg4[%c0_7, %c18_8], %6 {strides = array<i32>} : memref<20x20xf32, #tpu.memory_space<vmem>>, vector<20x2xf32>,
    %c0_9 = arith.constant 0 : index
    %c0_10 = arith.constant 0 : index
    %c0_11 = arith.constant 0 : index
    %c0_12 = arith.constant 0 : index
    %8 = vector.load %arg1[%c0_9, %c0_10, %c0_11, %c0_12] : memref<1x3x16x16xf32, #tpu.memory_space<vmem>>, vector<1x1x16x16xf32>
    %9 = vector.shape_cast %8 : vector<1x1x16x16xf32> to vector<16x16xf32>
    %cst_13 = arith.constant 7.624500e+01 : f32
    %10 = vector.broadcast %cst_13 : f32 to vector<16x16xf32>
    %11 = arith.mulf %10, %9 : vector<16x16xf32>
    %c0_14 = arith.constant 0 : index
    %c1 = arith.constant 1 : index
    %c0_15 = arith.constant 0 : index
    %c0_16 = arith.constant 0 : index
    %12 = vector.load %arg1[%c0_14, %c1, %c0_15, %c0_16] : memref<1x3x16x16xf32, #tpu.memory_space<vmem>>, vector<1x1x16x16xf32>
    %13 = vector.shape_cast %12 : vector<1x1x16x16xf32> to vector<16x16xf32>
    %cst_17 = arith.constant 1.496850e+02 : f32
    %14 = vector.broadcast %cst_17 : f32 to vector<16x16xf32>
    %15 = arith.mulf %14, %13 : vector<16x16xf32>
    %16 = arith.addf %11, %15 : vector<16x16xf32>
    %c0_18 = arith.constant 0 : index
    %c2 = arith.constant 2 : index
    %c0_19 = arith.constant 0 : index
    %c0_20 = arith.constant 0 : index
    %17 = vector.load %arg1[%c0_18, %c2, %c0_19, %c0_20] : memref<1x3x16x16xf32, #tpu.memory_space<vmem>>, vector<1x1x16x16xf32>
    %18 = vector.shape_cast %17 : vector<1x1x16x16xf32> to vector<16x16xf32>
    %cst_21 = arith.constant 2.907000e+01 : f32
    %19 = vector.broadcast %cst_21 : f32 to vector<16x16xf32>
    %20 = arith.mulf %19, %18 : vector<16x16xf32>
    %21 = arith.addf %16, %20 : vector<16x16xf32>
    %c2_22 = arith.constant 2 : index
    %c2_23 = arith.constant 2 : index
    %22 = vector.load %arg4[%c2_22, %c2_23] : memref<20x20xf32, #tpu.memory_space<vmem>>, vector<16x16xf32>
    tpu.vector_store %arg4[%c2_22, %c2_23], %21 {strides = array<i32>} : memref<20x20xf32, #tpu.memory_space<vmem>>, vector<16x16xf32>,
    %c0_24 = arith.constant 0 : index
    %c0_25 = arith.constant 0 : index
    %23 = vector.load %arg4[%c0_24, %c0_25] : memref<20x20xf32, #tpu.memory_space<vmem>>, vector<20x20xf32>
    %24 = vector.extract_strided_slice %23 {offsets = [0, 0], sizes = [16, 20], strides = [1, 1]} : vector<20x20xf32> to vector<16x20xf32>
    %25 = vector.extract_strided_slice %23 {offsets = [1, 0], sizes = [16, 20], strides = [1, 1]} : vector<20x20xf32> to vector<16x20xf32>
    %26 = vector.extract_strided_slice %23 {offsets = [2, 0], sizes = [16, 20], strides = [1, 1]} : vector<20x20xf32> to vector<16x20xf32>
    %27 = vector.extract_strided_slice %23 {offsets = [3, 0], sizes = [16, 20], strides = [1, 1]} : vector<20x20xf32> to vector<16x20xf32>
    %28 = vector.extract_strided_slice %23 {offsets = [4, 0], sizes = [16, 20], strides = [1, 1]} : vector<20x20xf32> to vector<16x20xf32>
    %29 = arith.addf %25, %26 : vector<16x20xf32>
    %30 = arith.addf %29, %27 : vector<16x20xf32>
    %31 = arith.addf %30, %24 : vector<16x20xf32>
    %32 = arith.addf %31, %28 : vector<16x20xf32>
    %33 = arith.addf %30, %26 : vector<16x20xf32>
    %34 = arith.subf %25, %27 : vector<16x20xf32>
    %35 = vector.extract_strided_slice %30 {offsets = [0, 1], sizes = [16, 16], strides = [1, 1]} : vector<16x20xf32> to vector<16x16xf32>
    %36 = vector.extract_strided_slice %30 {offsets = [0, 2], sizes = [16, 16], strides = [1, 1]} : vector<16x20xf32> to vector<16x16xf32>
    %37 = arith.addf %35, %36 : vector<16x16xf32>
    %38 = vector.extract_strided_slice %30 {offsets = [0, 3], sizes = [16, 16], strides = [1, 1]} : vector<16x20xf32> to vector<16x16xf32>
    %39 = arith.addf %37, %38 : vector<16x16xf32>
    %40 = vector.extract_strided_slice %32 {offsets = [0, 0], sizes = [16, 16], strides = [1, 1]} : vector<16x20xf32> to vector<16x16xf32>
    %41 = vector.extract_strided_slice %32 {offsets = [0, 1], sizes = [16, 16], strides = [1, 1]} : vector<16x20xf32> to vector<16x16xf32>
    %42 = arith.addf %40, %41 : vector<16x16xf32>
    %43 = vector.extract_strided_slice %32 {offsets = [0, 2], sizes = [16, 16], strides = [1, 1]} : vector<16x20xf32> to vector<16x16xf32>
    %44 = arith.addf %42, %43 : vector<16x16xf32>
    %45 = vector.extract_strided_slice %32 {offsets = [0, 3], sizes = [16, 16], strides = [1, 1]} : vector<16x20xf32> to vector<16x16xf32>
    %46 = arith.addf %44, %45 : vector<16x16xf32>
    %47 = vector.extract_strided_slice %32 {offsets = [0, 4], sizes = [16, 16], strides = [1, 1]} : vector<16x20xf32> to vector<16x16xf32>
    %48 = arith.addf %46, %47 : vector<16x16xf32>
    %49 = vector.extract_strided_slice %26 {offsets = [0, 2], sizes = [16, 16], strides = [1, 1]} : vector<16x20xf32> to vector<16x16xf32>
    %50 = arith.addf %48, %39 : vector<16x16xf32>
    %cst_26 = arith.constant 3.125000e-02 : f32
    %51 = vector.broadcast %cst_26 : f32 to vector<16x16xf32>
    %52 = arith.mulf %50, %51 : vector<16x16xf32>
    %cst_27 = arith.constant 6.250000e-02 : f32
    %53 = vector.broadcast %cst_27 : f32 to vector<16x16xf32>
    %54 = arith.mulf %49, %53 : vector<16x16xf32>
    %55 = arith.subf %52, %54 : vector<16x16xf32>
    %56 = vector.extract_strided_slice %33 {offsets = [0, 3], sizes = [16, 16], strides = [1, 1]} : vector<16x20xf32> to vector<16x16xf32>
    %57 = vector.extract_strided_slice %33 {offsets = [0, 1], sizes = [16, 16], strides = [1, 1]} : vector<16x20xf32> to vector<16x16xf32>
    %58 = arith.subf %56, %57 : vector<16x16xf32>
    %59 = vector.extract_strided_slice %34 {offsets = [0, 1], sizes = [16, 16], strides = [1, 1]} : vector<16x20xf32> to vector<16x16xf32>
    %60 = vector.extract_strided_slice %34 {offsets = [0, 2], sizes = [16, 16], strides = [1, 1]} : vector<16x20xf32> to vector<16x16xf32>
    %cst_28 = arith.constant 2.000000e+00 : f32
    %61 = vector.broadcast %cst_28 : f32 to vector<16x16xf32>
    %62 = arith.mulf %61, %60 : vector<16x16xf32>
    %63 = arith.addf %59, %62 : vector<16x16xf32>
    %64 = vector.extract_strided_slice %34 {offsets = [0, 3], sizes = [16, 16], strides = [1, 1]} : vector<16x20xf32> to vector<16x16xf32>
    %65 = arith.addf %63, %64 : vector<16x16xf32>
    %cst_29 = arith.constant 0.00787401571 : f32
    %66 = vector.broadcast %cst_29 : f32 to vector<16x16xf32>
    %67 = arith.mulf %55, %66 : vector<16x16xf32>
    %cst_30 = arith.constant 1.000000e-03 : f32
    %68 = vector.broadcast %cst_30 : f32 to vector<16x16xf32>
    %69 = arith.addf %67, %68 : vector<16x16xf32>
    %70 = math.sqrt %69 : vector<16x16xf32>
    %cst_31 = arith.constant 1.000000e+00 : f32
    %71 = vector.broadcast %cst_31 : f32 to vector<16x16xf32>
    %72 = arith.subf %71, %70 : vector<16x16xf32>
    %cst_32 = arith.constant 1.700000e+01 : f32
    %73 = vector.broadcast %cst_32 : f32 to vector<16x16xf32>
    %74 = arith.mulf %73, %72 : vector<16x16xf32>
    %cst_33 = arith.constant 3.000000e+00 : f32
    %75 = vector.broadcast %cst_33 : f32 to vector<16x16xf32>
    %76 = arith.addf %74, %75 : vector<16x16xf32>
    %cst_34 = arith.constant 1.270000e+02 : f32
    %77 = vector.broadcast %cst_34 : f32 to vector<16x16xf32>
    %78 = arith.subf %55, %77 : vector<16x16xf32>
    %cst_35 = arith.constant 2.343750e-02 : f32
    %79 = vector.broadcast %cst_35 : f32 to vector<16x16xf32>
    %80 = arith.mulf %79, %78 : vector<16x16xf32>
    %cst_36 = arith.constant 3.000000e+00 : f32
    %81 = vector.broadcast %cst_36 : f32 to vector<16x16xf32>
    %82 = arith.addf %80, %81 : vector<16x16xf32>
    %cst_37 = arith.constant 1.270000e+02 : f32
    %83 = vector.broadcast %cst_37 : f32 to vector<16x16xf32>
    %84 = arith.cmpf ole, %55, %83 : vector<16x16xf32>
    %85 = arith.select %84, %76, %82 : vector<16x16xi1>, vector<16x16xf32>
    %86 = arith.mulf %58, %58 : vector<16x16xf32>
    %87 = arith.mulf %65, %65 : vector<16x16xf32>
    %88 = arith.addf %86, %87 : vector<16x16xf32>
    %cst_38 = arith.constant 0.000000e+00 : f32
    %89 = vector.broadcast %cst_38 : f32 to vector<16x16xf32>
    %90 = arith.cmpf ogt, %88, %89 : vector<16x16xf32>
    %cst_39 = arith.constant 1.000000e-30 : f32
    %91 = vector.broadcast %cst_39 : f32 to vector<16x16xf32>
    %92 = arith.maximumf %88, %91 : vector<16x16xf32>
    %93 = math.log %92 : vector<16x16xf32>
    %cst_40 = arith.constant 1.200000e+00 : f32
    %94 = vector.broadcast %cst_40 : f32 to vector<16x16xf32>
    %95 = arith.mulf %94, %93 : vector<16x16xf32>
    %96 = math.exp %95 : vector<16x16xf32>
    %cst_41 = arith.constant 0.000000e+00 : f32
    %97 = vector.broadcast %cst_41 : f32 to vector<16x16xf32>
    %98 = arith.select %90, %96, %97 : vector<16x16xi1>, vector<16x16xf32>
    %cst_42 = arith.constant 1.872000e+00 : f32
    %99 = vector.broadcast %cst_42 : f32 to vector<16x16xf32>
    %100 = arith.mulf %99, %98 : vector<16x16xf32>
    %cst_43 = arith.constant 6.760000e+02 : f32
    %101 = vector.broadcast %cst_43 : f32 to vector<16x16xf32>
    %102 = arith.addf %88, %101 : vector<16x16xf32>
    %103 = arith.divf %100, %102 : vector<16x16xf32>
    %104 = arith.addf %85, %103 : vector<16x16xf32>
    %105 = arith.minimumf %85, %103 : vector<16x16xf32>
    %cst_44 = arith.constant 3.000000e-01 : f32
    %106 = vector.broadcast %cst_44 : f32 to vector<16x16xf32>
    %107 = arith.mulf %106, %105 : vector<16x16xf32>
    %108 = arith.subf %104, %107 : vector<16x16xf32>
    %cst_45 = arith.constant 5.000000e+00 : f32
    %109 = vector.broadcast %cst_45 : f32 to vector<16x16xf32>
    %110 = arith.maximumf %108, %109 : vector<16x16xf32>
    %cst_46 = arith.constant 0.00392156886 : f32
    %111 = vector.broadcast %cst_46 : f32 to vector<16x16xf32>
    %112 = arith.mulf %110, %111 : vector<16x16xf32>
    %cst_47 = arith.constant 0.000000e+00 : f32
    %113 = vector.broadcast %cst_47 : f32 to vector<16x16xf32>
    %cst_48 = arith.constant 0.000000e+00 : f32
    %114 = vector.broadcast %cst_48 : f32 to vector<16x16xf32>
    %c0_49 = arith.constant 0 : index
    %c0_50 = arith.constant 0 : index
    %c0_51 = arith.constant 0 : index
    %c0_52 = arith.constant 0 : index
    %115 = vector.load %arg2[%c0_49, %c0_50, %c0_51, %c0_52] : memref<1x3x16x16xf32, #tpu.memory_space<vmem>>, vector<1x1x16x16xf32>
    %116 = vector.shape_cast %115 : vector<1x1x16x16xf32> to vector<16x16xf32>
    %c0_53 = arith.constant 0 : index
    %c0_54 = arith.constant 0 : index
    %c0_55 = arith.constant 0 : index
    %c0_56 = arith.constant 0 : index
    %117 = vector.load %arg1[%c0_53, %c0_54, %c0_55, %c0_56] : memref<1x3x16x16xf32, #tpu.memory_space<vmem>>, vector<1x1x16x16xf32>
    %118 = vector.shape_cast %117 : vector<1x1x16x16xf32> to vector<16x16xf32>
    %119 = arith.subf %116, %118 : vector<16x16xf32>
    %120 = math.absf %119 : vector<16x16xf32>
    %121 = arith.addf %113, %120 : vector<16x16xf32>
    %122 = arith.mulf %119, %119 : vector<16x16xf32>
    %123 = arith.addf %114, %122 : vector<16x16xf32>
    %c0_57 = arith.constant 0 : index
    %c1_58 = arith.constant 1 : index
    %c0_59 = arith.constant 0 : index
    %c0_60 = arith.constant 0 : index
    %124 = vector.load %arg2[%c0_57, %c1_58, %c0_59, %c0_60] : memref<1x3x16x16xf32, #tpu.memory_space<vmem>>, vector<1x1x16x16xf32>
    %125 = vector.shape_cast %124 : vector<1x1x16x16xf32> to vector<16x16xf32>
    %c0_61 = arith.constant 0 : index
    %c1_62 = arith.constant 1 : index
    %c0_63 = arith.constant 0 : index
    %c0_64 = arith.constant 0 : index
    %126 = vector.load %arg1[%c0_61, %c1_62, %c0_63, %c0_64] : memref<1x3x16x16xf32, #tpu.memory_space<vmem>>, vector<1x1x16x16xf32>
    %127 = vector.shape_cast %126 : vector<1x1x16x16xf32> to vector<16x16xf32>
    %128 = arith.subf %125, %127 : vector<16x16xf32>
    %129 = math.absf %128 : vector<16x16xf32>
    %130 = arith.addf %121, %129 : vector<16x16xf32>
    %131 = arith.mulf %128, %128 : vector<16x16xf32>
    %132 = arith.addf %123, %131 : vector<16x16xf32>
    %c0_65 = arith.constant 0 : index
    %c2_66 = arith.constant 2 : index
    %c0_67 = arith.constant 0 : index
    %c0_68 = arith.constant 0 : index
    %133 = vector.load %arg2[%c0_65, %c2_66, %c0_67, %c0_68] : memref<1x3x16x16xf32, #tpu.memory_space<vmem>>, vector<1x1x16x16xf32>
    %134 = vector.shape_cast %133 : vector<1x1x16x16xf32> to vector<16x16xf32>
    %c0_69 = arith.constant 0 : index
    %c2_70 = arith.constant 2 : index
    %c0_71 = arith.constant 0 : index
    %c0_72 = arith.constant 0 : index
    %135 = vector.load %arg1[%c0_69, %c2_70, %c0_71, %c0_72] : memref<1x3x16x16xf32, #tpu.memory_space<vmem>>, vector<1x1x16x16xf32>
    %136 = vector.shape_cast %135 : vector<1x1x16x16xf32> to vector<16x16xf32>
    %137 = arith.subf %134, %136 : vector<16x16xf32>
    %138 = math.absf %137 : vector<16x16xf32>
    %139 = arith.addf %130, %138 : vector<16x16xf32>
    %140 = arith.mulf %137, %137 : vector<16x16xf32>
    %141 = arith.addf %132, %140 : vector<16x16xf32>
    %cst_73 = arith.constant 2.000000e+00 : f32
    %142 = vector.broadcast %cst_73 : f32 to vector<16x16xf32>
    %143 = arith.mulf %142, %139 : vector<16x16xf32>
    %cst_74 = arith.constant 3.000000e+00 : f32
    %144 = vector.broadcast %cst_74 : f32 to vector<16x16xf32>
    %145 = arith.mulf %144, %112 : vector<16x16xf32>
    %146 = arith.subf %143, %145 : vector<16x16xf32>
    %147 = arith.mulf %112, %146 : vector<16x16xf32>
    %148 = arith.subf %141, %147 : vector<16x16xf32>
    %cst_75 = arith.constant dense<0.000000e+00> : vector<16xf32>
    %149 = vector.multi_reduction <add>, %148, %cst_75 [1] : vector<16x16xf32> to vector<16xf32>
    %150 = vector.shape_cast %149 : vector<16xf32> to vector<16x1xf32>
    %cst_76 = arith.constant dense<0.000000e+00> : vector<1xf32>
    %151 = vector.multi_reduction <add>, %150, %cst_76 [0] : vector<16x1xf32> to vector<1xf32>
    %152 = vector.shape_cast %151 : vector<1xf32> to vector<1x1xf32>
    %c0_77 = arith.constant 0 : index
    %c0_78 = arith.constant 0 : index
    %c0_79 = arith.constant 0 : index
    %153 = vector.load %arg3[%c0_77, %c0_78, %c0_79] : memref<1x1x1xf32, #tpu.memory_space<vmem>>, vector<1x1x1xf32>
    %154 = vector.shape_cast %153 : vector<1x1x1xf32> to vector<1x1xf32>
    %155 = vector.shape_cast %152 : vector<1x1xf32> to vector<1x1x1xf32>
    tpu.vector_store %arg3[%c0_77, %c0_78, %c0_79], %155 {strides = array<i32>} : memref<1x1x1xf32, #tpu.memory_space<vmem>>, vector<1x1x1xf32>,
    return
  }
  func.func @transform_0(%arg0: i32) -> (i32, i32, i32, i32) {
    %c0_i32 = arith.constant 0 : i32
    %c0_i32_0 = arith.constant 0 : i32
    %c0_i32_1 = arith.constant 0 : i32
    %c0_i32_2 = arith.constant 0 : i32
    return %arg0, %c0_i32, %c0_i32_0, %c0_i32_1 : i32, i32, i32, i32
  }
  func.func @transform_1(%arg0: i32) -> (i32, i32, i32, i32) {
    %c0_i32 = arith.constant 0 : i32
    %c0_i32_0 = arith.constant 0 : i32
    %c0_i32_1 = arith.constant 0 : i32
    %c0_i32_2 = arith.constant 0 : i32
    return %arg0, %c0_i32, %c0_i32_0, %c0_i32_1 : i32, i32, i32, i32
  }
  func.func @transform_2(%arg0: i32) -> (i32, i32, i32) {
    %c0_i32 = arith.constant 0 : i32
    %c0_i32_0 = arith.constant 0 : i32
    %c0_i32_1 = arith.constant 0 : i32
    return %arg0, %c0_i32, %c0_i32_0 : i32, i32, i32
  }
}

</mosaic_0001>

<llo_original>
// kernel: tpu_custom_call.1
$region0: #{tpu_custom_call.1}
  #allocation0 [shape = 'u32[]', space=smem, size = 0x4, offset = 0x4, fixed_abs, tag = 'smem constant byte address 0x4 - core index']
  #allocation1 [shape = 'u32[144,128]{1,0:T(1,128)}', space=vmem, size = 0x12000, scoped, tag = 'internal scratch']
  #allocation2 [shape = 'f32[20,20]{1,0:T(8,128)}', space=vmem, size = 0x3000, scoped, tag = 'scratch operand']
  %s0 = inlined_call_operand.hbm [shape: f32[2,3,16,16], index: 0, kind: input, shape index: {}]
  %s1 = inlined_call_operand.hbm [shape: f32[2,3,16,16], index: 1, kind: input, shape index: {}]
  %s2 = inlined_call_operand.vmem [shape: f32[2,1,1], index: 2, kind: output, shape index: {}]
  %s3 = sld [smem:[#allocation0]]
  $region49: #{tpu_custom_call.1} parent=0
    _
  %s5 = ssub.s32 1, %s3
  %s6 = scalar_select 0, %s5, %s3
  $region1: #{tpu_custom_call.1} parent=0
    #allocation3 [shape = 'u8[49152]{0}', space=vmem, size = 0xc000, scoped, tag = 'input window, operand 0']
    #allocation4 [shape = 's32[2]{0}', space=sflag, size = 0x8, scoped, tag = 'scoped memory for tpu_custom_call.1']
    #allocation5 [shape = 'u8[49152]{0}', space=vmem, size = 0xc000, scoped, tag = 'input window, operand 1']
    #allocation6 [shape = 's32[2]{0}', space=sflag, size = 0x8, scoped, tag = 'scoped memory for tpu_custom_call.1']
    %7 = vsyncpa [#allocation4], 0
    %s8 = scalar_lea.sflag [#allocation4], 1
    %9 = vsyncpa %s8, 0
    %10 = vsyncpa [#allocation6], 0
    %s11 = scalar_lea.sflag [#allocation6], 1
    %12 = vsyncpa %s11, 0
    loop: start=0, step=1, limit=4
    $region2: #{tpu_custom_call.1} parent=1 // loop_pre_header
      _
    $region3: #{tpu_custom_call.1} parent=1 // loop_header
      %s14 = sphi 0, %s18
      %p15 = scmp.ge.s32.totalorder %s14, 4
      %s24 = sphi 0, %s26
      %s27 = sphi 0, %s24
      %s28 = sphi 0, %s27
      %s44 = sphi 0, %s28
      %s50 = sphi 0, %s52
      %s53 = sphi 0, %s50
      %s54 = sphi 0, %s53
      %s70 = sphi 0, %s54
      %s76 = sphi 0, %s78
      %s79 = sphi 0, %s76
      %s80 = sphi 0, %s79
      %s96 = sphi 0, %s80
    $region4: #{tpu_custom_call.1} parent=1 // loop_header_branch
      %17 = sbr.rel (%p15) target = $region8
    $region5: #{tpu_custom_call.1} parent=1 // loop_body
      %s19 = ssub.s32 %s14, 1
      %s20 = ssub.s32 %s14, 2
      %s21 = sadd.s32 %s14, 1
      %s22 = ssub.s32 %s14, %s21
      %p23 = scmp.eq.s32.totalorder %s22, 0
      %s25 = sadd.s32 %s24, 1
      %s26 = scalar_select %p23, %s24, %s25
      %p29 = pneg %p23
      %p30 = scmp.eq.s32.totalorder %s14, 1
      %p31 = por %p29, %p30
      %p32 = scmp.ne.s32.totalorder %s24, %s27
      %p33 = scmp.eq.s32.totalorder %s14, 0
      %p34 = por %p32, %p33
      %p35 = scmp.ne.s32.totalorder %s24, %s27
      %p36 = scmp.eq.s32.totalorder %s19, 1
      %p37 = por %p35, %p36
      %p38 = scmp.ne.s32.totalorder %s27, %s28
      %p39 = scmp.eq.s32.totalorder %s19, 0
      %p40 = por %p38, %p39
      %p41 = scmp.ne.s32.totalorder %s27, %s28
      %p42 = scmp.eq.s32.totalorder %s20, 1
      %p43 = por %p41, %p42
      %p45 = scmp.ne.s32.totalorder %s28, %s44
      %p46 = scmp.eq.s32.totalorder %s20, 0
      %p47 = por %p45, %p46
      %s48 = ssub.s32 %s14, %s21
      %p49 = scmp.eq.s32.totalorder %s48, 0
      %s51 = sadd.s32 %s50, 1
      %s52 = scalar_select %p49, %s50, %s51
      %p55 = pneg %p49
      %p56 = scmp.eq.s32.totalorder %s14, 1
      %p57 = por %p55, %p56
      %p58 = scmp.ne.s32.totalorder %s50, %s53
      %p59 = scmp.eq.s32.totalorder %s14, 0
      %p60 = por %p58, %p59
      %p61 = scmp.ne.s32.totalorder %s50, %s53
      %p62 = scmp.eq.s32.totalorder %s19, 1
      %p63 = por %p61, %p62
      %p64 = scmp.ne.s32.totalorder %s53, %s54
      %p65 = scmp.eq.s32.totalorder %s19, 0
      %p66 = por %p64, %p65
      %p67 = scmp.ne.s32.totalorder %s53, %s54
      %p68 = scmp.eq.s32.totalorder %s20, 1
      %p69 = por %p67, %p68
      %p71 = scmp.ne.s32.totalorder %s54, %s70
      %p72 = scmp.eq.s32.totalorder %s20, 0
      %p73 = por %p71, %p72
      %s74 = ssub.s32 %s14, %s21
      %p75 = scmp.eq.s32.totalorder %s74, 0
      %s77 = sadd.s32 %s76, 1
      %s78 = scalar_select %p75, %s76, %s77
      %p81 = pneg %p75
      %p82 = scmp.eq.s32.totalorder %s14, 1
      %p83 = por %p81, %p82
      %p84 = scmp.ne.s32.totalorder %s76, %s79
      %p85 = scmp.eq.s32.totalorder %s14, 0
      %p86 = por %p84, %p85
      %p87 = scmp.ne.s32.totalorder %s76, %s79
      %p88 = scmp.eq.s32.totalorder %s19, 1
      %p89 = por %p87, %p88
      %p90 = scmp.ne.s32.totalorder %s79, %s80
      %p91 = scmp.eq.s32.totalorder %s19, 0
      %p92 = por %p90, %p91
      %p93 = scmp.ne.s32.totalorder %s79, %s80
      %p94 = scmp.eq.s32.totalorder %s20, 1
      %p95 = por %p93, %p94
      %p97 = scmp.ne.s32.totalorder %s80, %s96
      %p98 = scmp.eq.s32.totalorder %s20, 0
      %p99 = por %p97, %p98
      %p100 = scmp.le.s32.totalorder 1, %s14
      %p101 = scmp.lt.s32.totalorder %s14, 3
      %p102 = pnand %p100, %p101
      %p103 = pneg %p102
      // Predicated region
      $region9: #{tpu_custom_call.1} parent=5 // pred_check
        _
      $region10: #{tpu_custom_call.1} parent=5 // pred_check_branch
        %105 = sbr.rel (%p102) target = $region12
      $region11: #{tpu_custom_call.1} parent=5 // pred_region
        %s106 = ssub.s32 %s14, 1
      $region12: #{tpu_custom_call.1} parent=5 // pred_fallthru
        _
      %p107 = scmp.lt.s32.totalorder %s14, 2
      // Predicated region
      $region13: #{tpu_custom_call.1} parent=5 // pred_check
        %p108 = pneg %p107
      $region14: #{tpu_custom_call.1} parent=5 // pred_check_branch
        %110 = sbr.rel (%p108) target = $region16
      $region15: #{tpu_custom_call.1} parent=5 // pred_region
        // Predicated region
        $region17: #{tpu_custom_call.1} parent=15 // pred_check
          %p111 = pneg %p34
        $region18: #{tpu_custom_call.1} parent=15 // pred_check_branch
          %113 = sbr.rel (%p111) target = $region20
        $region19: #{tpu_custom_call.1} parent=15 // pred_region
          %s114 = sand.u32 %s24, 1
          %s115 = scalar_lea.sflag [#allocation4], %s114
          %s116 = sand.u32 %s24, 1
          %s117 = smul.addr %s116, 48
          %s118 = scalar_lea.vmem [#allocation3], %s117
          %s120 = ssub.s32 768, 768
          %121 = vsyncadd %s115, %s120
          %s122 = smul.addr %s14, 6
          %s123 = smul.addr %s122, 128
          %s124 = scalar_lea.hbm %s0, %s123
          %s125 = sshll.u32 %s118, 4
          %s126 = int_to_ptr.vmem [resolvable:$true] %s125
          %131 = dma.hbm_to_vmem [thread:$0]  %s124, 768, %s126, %s115, 128, 128, 8
        $region20: #{tpu_custom_call.1} parent=15 // pred_fallthru
          _
        // Predicated region
        $region21: #{tpu_custom_call.1} parent=15 // pred_check
          %p132 = pneg %p60
        $region22: #{tpu_custom_call.1} parent=15 // pred_check_branch
          %134 = sbr.rel (%p132) target = $region24
        $region23: #{tpu_custom_call.1} parent=15 // pred_region
          %s135 = sand.u32 %s50, 1
          %s136 = scalar_lea.sflag [#allocation6], %s135
          %s137 = sand.u32 %s50, 1
          %s138 = smul.addr %s137, 48
          %s139 = scalar_lea.vmem [#allocation5], %s138
          %s141 = ssub.s32 768, 768
          %142 = vsyncadd %s136, %s141
          %s143 = smul.addr %s14, 6
          %s144 = smul.addr %s143, 128
          %s145 = scalar_lea.hbm %s1, %s144
          %s146 = sshll.u32 %s139, 4
          %s147 = int_to_ptr.vmem [resolvable:$true] %s146
          %152 = dma.hbm_to_vmem [thread:$0]  %s145, 768, %s147, %s136, 128, 128, 8
        $region24: #{tpu_custom_call.1} parent=15 // pred_fallthru
          _
      $region16: #{tpu_custom_call.1} parent=5 // pred_fallthru
        _
      %p153 = scmp.le.s32.totalorder 1, %s14
      %p154 = scmp.lt.s32.totalorder %s14, 3
      %p155 = pnand %p153, %p154
      %p156 = pneg %p155
      // Predicated region
      $region25: #{tpu_custom_call.1} parent=5 // pred_check
        _
      $region26: #{tpu_custom_call.1} parent=5 // pred_check_branch
        %158 = sbr.rel (%p155) target = $region28
      $region27: #{tpu_custom_call.1} parent=5 // pred_region
        %s159 = ssub.s32 %s14, 1
        %s160 = sand.u32 %s27, 1
        %s161 = scalar_lea.sflag [#allocation4], %s160
        %s162 = sand.u32 %s27, 1
        %s163 = smul.addr %s162, 48
        %s164 = scalar_lea.vmem [#allocation3], %s163
        // Predicated region
        $region29: #{tpu_custom_call.1} parent=27 // pred_check
          %p165 = pneg %p40
        $region30: #{tpu_custom_call.1} parent=27 // pred_check_branch
          %167 = sbr.rel (%p165) target = $region32
        $region31: #{tpu_custom_call.1} parent=27 // pred_region
          %168 = dma.done %s161, 768
        $region32: #{tpu_custom_call.1} parent=27 // pred_fallthru
          _
        %s169 = sand.u32 %s53, 1
        %s170 = scalar_lea.sflag [#allocation6], %s169
        %s171 = sand.u32 %s53, 1
        %s172 = smul.addr %s171, 48
        %s173 = scalar_lea.vmem [#allocation5], %s172
        // Predicated region
        $region33: #{tpu_custom_call.1} parent=27 // pred_check
          %p174 = pneg %p66
        $region34: #{tpu_custom_call.1} parent=27 // pred_check_branch
          %176 = sbr.rel (%p174) target = $region36
        $region35: #{tpu_custom_call.1} parent=27 // pred_region
          %177 = dma.done %s170, 768
        $region36: #{tpu_custom_call.1} parent=27 // pred_fallthru
          _
        %s178 = sand.u32 %s27, 1
        %s179 = scalar_lea.sflag [#allocation4], %s178
        %s180 = sand.u32 %s27, 1
        %s181 = smul.addr %s180, 48
        %s182 = scalar_lea.vmem [#allocation3], %s181
        %p183 = pneg %p40
        %p184 = pneg %p37
        %s185 = sand.u32 %s53, 1
        %s186 = scalar_lea.sflag [#allocation6], %s185
        %s187 = sand.u32 %s53, 1
        %s188 = smul.addr %s187, 48
        %s189 = scalar_lea.vmem [#allocation5], %s188
        %p190 = pneg %p66
        %p191 = pneg %p63
        %p192 = pneg %p92
        %p193 = pneg %p89
        %p194 = scmp.lt.s32.totalorder %s19, 1
        %s195 = scalar_select %p194, %s19, 1
        %s196 = scalar_lea.vmem %s2, %s195
        %p197 = scmp.lt.s32.totalorder %s19, 1
        %s198 = scalar_select %p197, %s19, 1
        %s199 = scalar_lea.vmem %s2, %s198
        %vm200 = vcmask 156672
        %201 = vst.msk [vmem:[#allocation2] sm:$0x3] %vm200, 0.0
        %202 = vst.msk [vmem:[#allocation2 + $0x12] sm:$0x3] %vm200, 0.0
        %vm203 = vcmask 15360
        %204 = vst.msk [vmem:[#allocation2] sm:$0xff] %vm203, 0.0
        %205 = vst.msk [vmem:[#allocation2 + $0x8] sm:$0xff] %vm203, 0.0
        %vm206 = vcmask 11264
        %207 = vst.msk [vmem:[#allocation2 + $0x10] sm:$0xf] %vm206, 0.0
        %vm208 = vcmask 162960
        %209 = vst.msk [vmem:[#allocation2] sm:$0xff] %vm208, 0.0
        %210 = vst.msk [vmem:[#allocation2 + $0x8] sm:$0xff] %vm208, 0.0
        %vm211 = vcmask 158864
        %212 = vst.msk [vmem:[#allocation2 + $0x10] sm:$0xf] %vm211, 0.0
        %v213 = vld [vmem:[%s164] sm:$0xff]
        %v214 = vld [vmem:[%s164 + $0x8] sm:$0xff]
        %v215 = vmul.f32 %v213, 76.245
        %v216 = vmul.f32 %v214, 76.245
        %s217 = scalar_lea.vmem %s164, 16 [#allocation3]
        %v218 = vld [vmem:[%s217] sm:$0xff]
        %v219 = vld [vmem:[%s217 + $0x8] sm:$0xff]
        %v220 = vmul.f32 %v218, 149.685
        %v221 = vmul.f32 %v219, 149.685
        %v222 = vadd.f32 %v215, %v220
        %v223 = vadd.f32 %v216, %v221
        %s224 = scalar_lea.vmem %s164, 32 [#allocation3]
        %v225 = vld [vmem:[%s224] sm:$0xff]
        %v226 = vld [vmem:[%s224 + $0x8] sm:$0xff]
        %v227 = vmul.f32 %v225, 29.07
        %v228 = vmul.f32 %v226, 29.07
        %v229 = vadd.f32 %v222, %v227
        %v230 = vadd.f32 %v223, %v228
        %233 = vrot.lane.b32.xlu0 %v229, 2
        %v234 = vpop.permute.xlu0 %233
        %235 = vrot.lane.b32.xlu0 %v230, 2
        %v236 = vpop.permute.xlu0 %235
        %vm239 = vcmask 146448
        %240 = vst.msk [vmem:[#allocation2 + $0x2] sm:$0xff] %vm239, %v234
        %241 = vst.msk [vmem:[#allocation2 + $0xa] sm:$0xff] %vm239, %v236
        %v242 = vld [vmem:[#allocation2] sm:$0xff]
        %v243 = vld [vmem:[#allocation2 + $0x8] sm:$0xff]
        %v244 = vld [vmem:[#allocation2 + $0x10] sm:$0xf]
        %vm248 = vcmask 1046528
        %v249 = vrot.slane %v242, 1
        %v250 = vrot.slane %v243, 1
        %v251 = vsel %vm248, %v249, %v250
        %v252 = vrot.slane %v244, 1
        %v253 = vsel %vm248, %v250, %v252
        %v257 = vadd.f32 %v242, %v251
        %v258 = vadd.f32 %v243, %v253
        %v259 = vadd.f32 %v244, %v252
        %vm260 = vcmask 1045504
        %v261 = vrot.slane %v242, 2
        %v262 = vrot.slane %v243, 2
        %v263 = vsel %vm260, %v261, %v262
        %v264 = vrot.slane %v244, 2
        %v265 = vsel %vm260, %v262, %v264
        %v269 = vadd.f32 %v257, %v263
        %v270 = vadd.f32 %v258, %v265
        %v271 = vadd.f32 %v259, %v264
        %vm272 = vcmask 1040384
        %v273 = vrot.slane %v242, 7
        %v274 = vrot.slane %v243, 7
        %v275 = vsel %vm272, %v273, %v274
        %v279 = vadd.f32 %v269, %v273
        %v280 = vadd.f32 %v270, %v275
        %v281 = vadd.f32 %v271, %v274
        %vm282 = vcmask 1044480
        %v283 = vrot.slane %v242, 3
        %v284 = vrot.slane %v243, 3
        %v285 = vsel %vm282, %v283, %v284
        %v286 = vrot.slane %v244, 3
        %v287 = vsel %vm282, %v284, %v286
        %v291 = vadd.f32 %v279, %v285
        %v292 = vadd.f32 %v280, %v287
        %v293 = vadd.f32 %v281, %v286
        %v294 = vadd.f32 %v269, %v251
        %v295 = vadd.f32 %v270, %v253
        %v296 = vadd.f32 %v271, %v252
        %v297 = vsub.f32 %v242, %v263
        %v298 = vsub.f32 %v243, %v265
        %v299 = vsub.f32 %v244, %v264
        %303 = vrot.lane.b32.xlu0 %v269, 127
        %v304 = vpop.permute.xlu0 %303
        %305 = vrot.lane.b32.xlu0 %v270, 127
        %v306 = vpop.permute.xlu0 %305
        %307 = vrot.lane.b32.xlu0 %v271, 127
        %v308 = vpop.permute.xlu0 %307
        %v312 = vadd.f32 %v269, %v304
        %v313 = vadd.f32 %v270, %v306
        %v314 = vadd.f32 %v271, %v308
        %315 = vrot.lane.b32.xlu0 %v269, 126
        %v316 = vpop.permute.xlu0 %315
        %317 = vrot.lane.b32.xlu0 %v270, 126
        %v318 = vpop.permute.xlu0 %317
        %319 = vrot.lane.b32.xlu0 %v271, 126
        %v320 = vpop.permute.xlu0 %319
        %v324 = vadd.f32 %v312, %v316
        %v325 = vadd.f32 %v313, %v318
        %v326 = vadd.f32 %v314, %v320
        %330 = vrot.lane.b32.xlu0 %v291, 127
        %v331 = vpop.permute.xlu0 %330
        %332 = vrot.lane.b32.xlu0 %v292, 127
        %v333 = vpop.permute.xlu0 %332
        %334 = vrot.lane.b32.xlu0 %v293, 127
        %v335 = vpop.permute.xlu0 %334
        %v339 = vadd.f32 %v291, %v331
        %v340 = vadd.f32 %v292, %v333
        %v341 = vadd.f32 %v293, %v335
        %342 = vrot.lane.b32.xlu0 %v291, 126
        %v343 = vpop.permute.xlu0 %342
        %344 = vrot.lane.b32.xlu0 %v292, 126
        %v345 = vpop.permute.xlu0 %344
        %346 = vrot.lane.b32.xlu0 %v293, 126
        %v347 = vpop.permute.xlu0 %346
        %v351 = vadd.f32 %v339, %v343
        %v352 = vadd.f32 %v340, %v345
        %v353 = vadd.f32 %v341, %v347
        %354 = vrot.lane.b32.xlu0 %v291, 125
        %v355 = vpop.permute.xlu0 %354
        %356 = vrot.lane.b32.xlu0 %v292, 125
        %v357 = vpop.permute.xlu0 %356
        %358 = vrot.lane.b32.xlu0 %v293, 125
        %v359 = vpop.permute.xlu0 %358
        %v363 = vadd.f32 %v351, %v355
        %v364 = vadd.f32 %v352, %v357
        %v365 = vadd.f32 %v353, %v359
        %366 = vrot.lane.b32.xlu0 %v291, 124
        %v367 = vpop.permute.xlu0 %366
        %368 = vrot.lane.b32.xlu0 %v292, 124
        %v369 = vpop.permute.xlu0 %368
        %370 = vrot.lane.b32.xlu0 %v293, 124
        %v371 = vpop.permute.xlu0 %370
        %v375 = vadd.f32 %v363, %v367
        %v376 = vadd.f32 %v364, %v369
        %v377 = vadd.f32 %v365, %v371
        %381 = vrot.lane.b32.xlu0 %v324, 127
        %v382 = vpop.permute.xlu0 %381
        %383 = vrot.lane.b32.xlu0 %v325, 127
        %v384 = vpop.permute.xlu0 %383
        %385 = vrot.lane.b32.xlu0 %v326, 127
        %v386 = vpop.permute.xlu0 %385
        %v390 = vadd.f32 %v375, %v382
        %v391 = vadd.f32 %v376, %v384
        %v392 = vadd.f32 %v377, %v386
        %v393 = vmul.f32 %v390, 0.03125
        %v394 = vmul.f32 %v391, 0.03125
        %v395 = vmul.f32 %v392, 0.03125
        %v396 = vmul.f32 %v242, 0.0625
        %v397 = vmul.f32 %v243, 0.0625
        %v398 = vmul.f32 %v244, 0.0625
        %v402 = vrot.slane %v396, 1
        %v403 = vrot.slane %v397, 1
        %v404 = vsel %vm248, %v402, %v403
        %v405 = vrot.slane %v398, 1
        %v406 = vsel %vm248, %v403, %v405
        %407 = vrot.lane.b32.xlu0 %v404, 126
        %v408 = vpop.permute.xlu0 %407
        %409 = vrot.lane.b32.xlu0 %v406, 126
        %v410 = vpop.permute.xlu0 %409
        %411 = vrot.lane.b32.xlu0 %v405, 126
        %v412 = vpop.permute.xlu0 %411
        %v416 = vsub.f32 %v393, %v408
        %v417 = vsub.f32 %v394, %v410
        %v418 = vsub.f32 %v395, %v412
        %422 = vrot.lane.b32.xlu0 %v294, 2
        %v423 = vpop.permute.xlu0 %422
        %424 = vrot.lane.b32.xlu0 %v295, 2
        %v425 = vpop.permute.xlu0 %424
        %426 = vrot.lane.b32.xlu0 %v296, 2
        %v427 = vpop.permute.xlu0 %426
        %v431 = vsub.f32 %v294, %v423
        %v432 = vsub.f32 %v295, %v425
        %v433 = vsub.f32 %v296, %v427
        %v434 = vmul.f32 %v297, 2.0
        %v435 = vmul.f32 %v298, 2.0
        %v436 = vmul.f32 %v299, 2.0
        %440 = vrot.lane.b32.xlu0 %v434, 127
        %v441 = vpop.permute.xlu0 %440
        %442 = vrot.lane.b32.xlu0 %v435, 127
        %v443 = vpop.permute.xlu0 %442
        %444 = vrot.lane.b32.xlu0 %v436, 127
        %v445 = vpop.permute.xlu0 %444
        %v449 = vadd.f32 %v297, %v441
        %v450 = vadd.f32 %v298, %v443
        %v451 = vadd.f32 %v299, %v445
        %455 = vrot.lane.b32.xlu0 %v297, 126
        %v456 = vpop.permute.xlu0 %455
        %457 = vrot.lane.b32.xlu0 %v298, 126
        %v458 = vpop.permute.xlu0 %457
        %459 = vrot.lane.b32.xlu0 %v299, 126
        %v460 = vpop.permute.xlu0 %459
        %v464 = vadd.f32 %v449, %v456
        %v465 = vadd.f32 %v450, %v458
        %v466 = vadd.f32 %v451, %v460
        %v467 = vmul.f32 %v416, 0.007874016
        %v468 = vmul.f32 %v417, 0.007874016
        %v469 = vmul.f32 %v418, 0.007874016
        %v470 = vadd.f32 %v467, 0.001
        %v471 = vadd.f32 %v468, 0.001
        %v472 = vadd.f32 %v469, 0.001
        %v473 = vrsqrt.pop %v470
        %v474 = vmul.f32 %v470, %v473
        %vm475 = vcmp.eq.f32.partialorder %v470, inf
        %v476 = vsel %vm475, %v470, %v474
        %vm477 = vcmp.eq.f32.partialorder %v470, 0.0
        %v478 = vand.u32 %v470, 2147483648
        %v479 = vsel %vm477, %v478, %v476
        %v480 = vrsqrt.pop %v471
        %v481 = vmul.f32 %v471, %v480
        %vm482 = vcmp.eq.f32.partialorder %v471, inf
        %v483 = vsel %vm482, %v471, %v481
        %vm484 = vcmp.eq.f32.partialorder %v471, 0.0
        %v485 = vand.u32 %v471, 2147483648
        %v486 = vsel %vm484, %v485, %v483
        %v487 = vrsqrt.pop %v472
        %v488 = vmul.f32 %v472, %v487
        %vm489 = vcmp.eq.f32.partialorder %v472, inf
        %v490 = vsel %vm489, %v472, %v488
        %vm491 = vcmp.eq.f32.partialorder %v472, 0.0
        %v492 = vand.u32 %v472, 2147483648
        %v493 = vsel %vm491, %v492, %v490
        %v494 = vsub.f32 1.0, %v479
        %v495 = vsub.f32 1.0, %v486
        %v496 = vsub.f32 1.0, %v493
        %v497 = vmul.f32 %v494, 17.0
        %v498 = vmul.f32 %v495, 17.0
        %v499 = vmul.f32 %v496, 17.0
        %v500 = vadd.f32 %v497, 3.0
        %v501 = vadd.f32 %v498, 3.0
        %v502 = vadd.f32 %v499, 3.0
        %v503 = vsub.f32 %v416, 127.0
        %v504 = vsub.f32 %v417, 127.0
        %v505 = vsub.f32 %v418, 127.0
        %v506 = vmul.f32 %v503, 0.0234375
        %v507 = vmul.f32 %v504, 0.0234375
        %v508 = vmul.f32 %v505, 0.0234375
        %v509 = vadd.f32 %v506, 3.0
        %v510 = vadd.f32 %v507, 3.0
        %v511 = vadd.f32 %v508, 3.0
        %vm512 = vcmp.le.f32.partialorder %v416, 127.0
        %vm513 = vcmp.le.f32.partialorder %v417, 127.0
        %vm514 = vcmp.le.f32.partialorder %v418, 127.0
        %v515 = vsel %vm512, %v500, %v509
        %v516 = vsel %vm513, %v501, %v510
        %v517 = vsel %vm514, %v502, %v511
        %v518 = vmul.f32 %v431, %v431
        %v519 = vmul.f32 %v432, %v432
        %v520 = vmul.f32 %v433, %v433
        %v521 = vmul.f32 %v464, %v464
        %v522 = vmul.f32 %v465, %v465
        %v523 = vmul.f32 %v466, %v466
        %527 = vrot.lane.b32.xlu0 %v521, 2
        %v528 = vpop.permute.xlu0 %527
        %529 = vrot.lane.b32.xlu0 %v522, 2
        %v530 = vpop.permute.xlu0 %529
        %531 = vrot.lane.b32.xlu0 %v523, 2
        %v532 = vpop.permute.xlu0 %531
        %v536 = vadd.f32 %v518, %v528
        %v537 = vadd.f32 %v519, %v530
        %v538 = vadd.f32 %v520, %v532
        %vm539 = vcmp.gt.f32.partialorder %v536, 0.0
        %vm540 = vcmp.gt.f32.partialorder %v537, 0.0
        %vm541 = vcmp.gt.f32.partialorder %v538, 0.0
        %v542 = vmax.f32 %v536, 1e-30
        %v543 = vmax.f32 %v537, 1e-30
        %v544 = vmax.f32 %v538, 1e-30
        %v545 = vlog2.pop %v542
        %v546 = vmul.f32 %v545, 0.6931472
        %v547 = vlog2.pop %v543
        %v548 = vmul.f32 %v547, 0.6931472
        %v549 = vlog2.pop %v544
        %v550 = vmul.f32 %v549, 0.6931472
        %v551 = vmul.f32 %v546, 1.2
        %v552 = vmul.f32 %v548, 1.2
        %v553 = vmul.f32 %v550, 1.2
        %v554 = vmul.f32 %v551, 1.442695
        %v555 = vpow.pop %v554
        %v556 = vmul.f32 %v552, 1.442695
        %v557 = vpow.pop %v556
        %v558 = vmul.f32 %v553, 1.442695
        %v559 = vpow.pop %v558
        %v560 = vsel %vm539, %v555, 0.0
        %v561 = vsel %vm540, %v557, 0.0
        %v562 = vsel %vm541, %v559, 0.0
        %v563 = vmul.f32 %v560, 1.872
        %v564 = vmul.f32 %v561, 1.872
        %v565 = vmul.f32 %v562, 1.872
        %v566 = vadd.f32 %v536, 676.0
        %v567 = vadd.f32 %v537, 676.0
        %v568 = vadd.f32 %v538, 676.0
        %v569 = vrcp.pop %v566
        %v570 = vmul.f32 %v563, %v569
        %v571 = vrcp.pop %v567
        %v572 = vmul.f32 %v564, %v571
        %v573 = vrcp.pop %v568
        %v574 = vmul.f32 %v565, %v573
        %578 = vrot.lane.b32.xlu0 %v570, 125
        %v579 = vpop.permute.xlu0 %578
        %580 = vrot.lane.b32.xlu0 %v572, 125
        %v581 = vpop.permute.xlu0 %580
        %582 = vrot.lane.b32.xlu0 %v574, 125
        %v583 = vpop.permute.xlu0 %582
        %v587 = vadd.f32 %v515, %v579
        %v588 = vadd.f32 %v516, %v581
        %v589 = vadd.f32 %v517, %v583
        %v590 = vmin.f32 %v515, %v579
        %v591 = vmin.f32 %v516, %v581
        %v592 = vmin.f32 %v517, %v583
        %v593 = vmul.f32 %v590, 0.3
        %v594 = vmul.f32 %v591, 0.3
        %v595 = vmul.f32 %v592, 0.3
        %v596 = vsub.f32 %v587, %v593
        %v597 = vsub.f32 %v588, %v594
        %v598 = vsub.f32 %v589, %v595
        %v599 = vmax.f32 %v596, 5.0
        %v600 = vmax.f32 %v597, 5.0
        %v601 = vmax.f32 %v598, 5.0
        %v602 = vmul.f32 %v599, 0.003921569
        %v603 = vmul.f32 %v600, 0.003921569
        %v604 = vmul.f32 %v601, 0.003921569
        %v605 = vld [vmem:[%s173] sm:$0xff]
        %v606 = vld [vmem:[%s173 + $0x8] sm:$0xff]
        %v607 = vld [vmem:[%s164] sm:$0xff]
        %v608 = vld [vmem:[%s164 + $0x8] sm:$0xff]
        %v609 = vsub.f32 %v605, %v607
        %v610 = vsub.f32 %v606, %v608
        %v611 = vand.u32 2147483647, %v609
        %v612 = vand.u32 2147483647, %v610
        %v613 = vadd.f32 %v611, 0.0
        %v614 = vadd.f32 %v612, 0.0
        %v615 = vmul.f32 %v609, %v609
        %v616 = vmul.f32 %v610, %v610
        %v617 = vadd.f32 %v615, 0.0
        %v618 = vadd.f32 %v616, 0.0
        %s619 = scalar_lea.vmem %s173, 16 [#allocation5]
        %v620 = vld [vmem:[%s619] sm:$0xff]
        %v621 = vld [vmem:[%s619 + $0x8] sm:$0xff]
        %v622 = vld [vmem:[%s217] sm:$0xff]
        %v623 = vld [vmem:[%s217 + $0x8] sm:$0xff]
        %v624 = vsub.f32 %v620, %v622
        %v625 = vsub.f32 %v621, %v623
        %v626 = vand.u32 2147483647, %v624
        %v627 = vand.u32 2147483647, %v625
        %v628 = vadd.f32 %v613, %v626
        %v629 = vadd.f32 %v614, %v627
        %v630 = vmul.f32 %v624, %v624
        %v631 = vmul.f32 %v625, %v625
        %v632 = vadd.f32 %v617, %v630
        %v633 = vadd.f32 %v618, %v631
        %s634 = scalar_lea.vmem %s173, 32 [#allocation5]
        %v635 = vld [vmem:[%s634] sm:$0xff]
        %v636 = vld [vmem:[%s634 + $0x8] sm:$0xff]
        %v637 = vld [vmem:[%s224] sm:$0xff]
        %v638 = vld [vmem:[%s224 + $0x8] sm:$0xff]
        %v639 = vsub.f32 %v635, %v637
        %v640 = vsub.f32 %v636, %v638
        %v641 = vand.u32 2147483647, %v639
        %v642 = vand.u32 2147483647, %v640
        %v643 = vadd.f32 %v628, %v641
        %v644 = vadd.f32 %v629, %v642
        %v645 = vmul.f32 %v639, %v639
        %v646 = vmul.f32 %v640, %v640
        %v647 = vadd.f32 %v632, %v645
        %v648 = vadd.f32 %v633, %v646
        %v649 = vmul.f32 %v643, 2.0
        %v650 = vmul.f32 %v644, 2.0
        %v651 = vmul.f32 %v602, 3.0
        %v652 = vmul.f32 %v603, 3.0
        %v653 = vmul.f32 %v604, 3.0
        %v657 = vrot.slane %v651, 1
        %v658 = vrot.slane %v652, 1
        %v659 = vsel %vm248, %v657, %v658
        %v660 = vrot.slane %v653, 1
        %v661 = vsel %vm248, %v658, %v660
        %v664 = vsub.f32 %v649, %v659
        %v665 = vsub.f32 %v650, %v661
        %v668 = vrot.slane %v664, 7
        %v669 = vrot.slane %v665, 7
        %v670 = vsel %vm272, %v668, %v669
        %v674 = vmul.f32 %v602, %v668
        %v675 = vmul.f32 %v603, %v670
        %v676 = vmul.f32 %v604, %v669
        %v680 = vrot.slane %v674, 1
        %v681 = vrot.slane %v675, 1
        %v682 = vsel %vm248, %v680, %v681
        %v683 = vrot.slane %v676, 1
        %v684 = vsel %vm248, %v681, %v683
        %v687 = vsub.f32 %v647, %v682
        %v688 = vsub.f32 %v648, %v684
        %vm689 = vcmask 130048
        %v690 = vsel %vm689, %v687, 0.0
        %691 = vadd.xlane.f32.xlu0 %v690
        %v692 = vpop.xlane.xlu0 %691
        %v693 = vsel %vm689, %v688, 0.0
        %694 = vadd.xlane.f32.xlu0 %v693
        %v695 = vpop.xlane.xlu0 %694
        %v696 = vadd.f32 %v692, %v695
        %v697 = vrot.slane %v696, 4
        %v698 = vadd.f32 %v696, %v697
        %v699 = vrot.slane %v698, 2
        %v700 = vadd.f32 %v698, %v699
        %v701 = vrot.slane %v700, 1
        %v702 = vadd.f32 %v700, %v701
        %vm703 = vcmask 0
        %704 = vst.msk [vmem:[%s199] sm:$0x1] %vm703, %v702
        %p705 = scmp.lt.s32.totalorder %s19, 1
        %s706 = scalar_select %p705, %s19, 1
        %s707 = scalar_lea.vmem %s2, %s706
        // Predicated region
        $region37: #{tpu_custom_call.1} parent=27 // pred_check
          %p708 = pneg %p89
        $region38: #{tpu_custom_call.1} parent=27 // pred_check_branch
          %710 = sbr.rel (%p708) target = $region40
        $region39: #{tpu_custom_call.1} parent=27 // pred_region
          _
        $region40: #{tpu_custom_call.1} parent=27 // pred_fallthru
          _
      $region28: #{tpu_custom_call.1} parent=5 // pred_fallthru
        _
      %p711 = scmp.le.s32.totalorder 2, %s14
      // Predicated region
      $region41: #{tpu_custom_call.1} parent=5 // pred_check
        %p712 = pneg %p711
      $region42: #{tpu_custom_call.1} parent=5 // pred_check_branch
        %714 = sbr.rel (%p712) target = $region44
      $region43: #{tpu_custom_call.1} parent=5 // pred_region
        %s715 = ssub.s32 %s14, 2
        // Predicated region
        $region45: #{tpu_custom_call.1} parent=43 // pred_check
          %p716 = pneg %p95
        $region46: #{tpu_custom_call.1} parent=43 // pred_check_branch
          %718 = sbr.rel (%p716) target = $region48
        $region47: #{tpu_custom_call.1} parent=43 // pred_region
          %p719 = scmp.lt.s32.totalorder %s20, 1
          %s720 = scalar_select %p719, %s20, 1
          %s721 = scalar_lea.vmem %s2, %s720
        $region48: #{tpu_custom_call.1} parent=43 // pred_fallthru
          _
      $region44: #{tpu_custom_call.1} parent=5 // pred_fallthru
        _
    $region6: #{tpu_custom_call.1} parent=1 // loop_footer
      %s18 = sadd.s32 1, %s14
    $region7: #{tpu_custom_call.1} parent=1 // loop_footer_branch
      %13 = sbr.rel target = $region3
    $region8: #{tpu_custom_call.1} parent=1 // loop_exit
      _
    %722 = vsyncpa [#allocation4], 1
    %s723 = scalar_lea.sflag [#allocation4], 1
    %724 = vsyncpa %s723, 1
    %725 = vsyncpa [#allocation6], 1
    %s726 = scalar_lea.sflag [#allocation6], 1
    %727 = vsyncpa %s726, 1

</llo_original>
